<compile_context>
chip_gen: v6e
topology: v6e:2x2x1
jax: 0.10.0
libtpu: 0.0.40
codegen_flags: <defaults>
</compile_context>

<pallas_src>
import functools

import jax
import jax.numpy as jnp
from jax.experimental import pallas as pl
from jax.experimental.pallas import tpu as pltpu

DEFAULT_ALPHA = (0.2, 0.3, 0.5)   # module default
GAMMA = 2                         # module default; implemented as an explicit square
TILE_N = 2048                     # batch elements (lanes) per grid step


def _round_up(x, m):
    return (x + m - 1) // m * m


def _focal_loss_kernel(pred_ref, tgt_ref, out_ref, *, num_classes, alpha):
    """One tile: pred_ref (C, T) f32, tgt_ref (1, T) i32, out_ref (1, 1, 128) f32."""
    pred = pred_ref[...]                       # (C, T)
    tgt = tgt_ref[...]                         # (1, T) int32

    # ---- log-softmax over the class (sublane) axis, unrolled (C is tiny) ----
    m = pred[0:1, :]
    for c in range(1, num_classes):
        m = jnp.maximum(m, pred[c:c + 1, :])   # (1, T)
    e = jnp.exp(pred - m)                      # (C, T)  -- the only exp
    sum_e = e[0:1, :]
    for c in range(1, num_classes):
        sum_e = sum_e + e[c:c + 1, :]          # (1, T)
    lse = jnp.log(sum_e) + m                   # (1, T)  log-sum-exp

    # ---- gather pred / exp / alpha at the target class via a select chain ----
    p_t = jnp.zeros_like(m)
    e_t = jnp.zeros_like(m)
    a_t = jnp.zeros_like(m)
    for c in range(num_classes):
        sel = tgt == c                         # padded lanes (tgt = -1) never match
        p_t = jnp.where(sel, pred[c:c + 1, :], p_t)
        e_t = jnp.where(sel, e[c:c + 1, :], e_t)
        a_t = jnp.where(sel, alpha[c], a_t)    # compile-time scalar per class

    ce = lse - p_t                             # = -log_softmax[target]
    # pt reuses the softmax numerator/denominator -> no second exp.
    # (pl.reciprocal(..., approx=True) is cheaper still if ~1e-3 error is OK.)
    pt = e_t * pl.reciprocal(sum_e)            # (1, T)
    one_minus_pt = 1.0 - pt
    # TODO(synk): non-integer gamma would need jnp.power (log+exp on the EUP);
    # the module's default gamma=2 is lowered to an explicit square instead.
    focal = a_t * one_minus_pt * one_minus_pt * ce   # (1, T); zero on padded lanes

    # Per-tile partial sum, broadcast across the (1, 1, 128) output block.
    out_ref[...] = jnp.broadcast_to(jnp.sum(focal), (1, 1, 128))


def multiclass_focal_loss(pred, target, alpha=DEFAULT_ALPHA, tile_n=TILE_N):
    """pred: (N, C) float, target: (N,) int -> scalar mean focal loss."""
    n, c = pred.shape
    assert len(alpha) == c, "alpha must provide one weight per class"

    # Class-major, lane-dense layout.
    pred_t = jnp.asarray(pred, jnp.float32).T             # (C, N)
    tgt = jnp.asarray(target, jnp.int32).reshape(1, n)    # (1, N)

    tile = min(tile_n, _round_up(n, 128))                  # lane-aligned tile
    n_pad = _round_up(n, tile)
    if n_pad != n:
        pred_t = jnp.pad(pred_t, ((0, 0), (0, n_pad - n)))
        tgt = jnp.pad(tgt, ((0, 0), (0, n_pad - n)), constant_values=-1)
    num_tiles = n_pad // tile

    kernel = functools.partial(
        _focal_loss_kernel,
        num_classes=c,
        alpha=tuple(float(a) for a in alpha),
    )

    out = pl.pallas_call(
        kernel,
        out_shape=jax.ShapeDtypeStruct((num_tiles, 1, 128), jnp.float32),
        grid_spec=pltpu.PrefetchScalarGridSpec(
            num_scalar_prefetch=0,
            grid=(num_tiles,),
            in_specs=[
                pl.BlockSpec((c, tile), lambda i: (0, i)),   # logits (C, N)
                pl.BlockSpec((1, tile), lambda i: (0, i)),   # targets (1, N)
            ],
            out_specs=pl.BlockSpec((1, 1, 128), lambda i: (i, 0, 0)),
        ),
        compiler_params=pltpu.CompilerParams(
            dimension_semantics=("parallel",),   # independent tiles -> both v7x cores
        ),
    )(pred_t, tgt)

    # reduction='mean': sum per-tile partials (all 128 lanes hold the same value)
    # and divide by the true (unpadded) batch size.
    return jnp.sum(out[:, 0, 0]) / n


if __name__ == "__main__":
    key = jax.random.PRNGKey(0)
    k_pred, k_tgt = jax.random.split(key)

    # Module defaults: alpha=(0.2, 0.3, 0.5) -> 3 classes, gamma=2, reduction='mean'.
    N, C = 37, 3   # non-multiple-of-128 batch exercises the padded/masked tail
    pred = jax.random.normal(k_pred, (N, C), dtype=jnp.float32)
    target = jax.random.randint(k_tgt, (N,), 0, C, dtype=jnp.int32)

    loss = multiclass_focal_loss(pred, target)
    jax.block_until_ready(loss)

    # Pure-JAX reference (same math as the PyTorch forward).
    log_sm = jax.nn.log_softmax(pred, axis=1)
    logpt = jnp.take_along_axis(log_sm, target[:, None], axis=1)[:, 0]
    alpha_ref = jnp.array(DEFAULT_ALPHA, dtype=jnp.float32)
    ref = jnp.mean(alpha_ref[target] * (1.0 - jnp.exp(logpt)) ** GAMMA * (-logpt))
    assert jnp.allclose(loss, ref, atol=1e-5, rtol=1e-5), (loss, ref)

    print("KERNEL_OK")
</pallas_src>

<mosaic_0001>
module attributes {stable_mosaic.version = 11 : i64} {
  func.func @_focal_loss_kernel(%arg0: i32, %arg1: memref<3x128xf32, #tpu.memory_space<vmem>>, %arg2: memref<1x128xi32, #tpu.memory_space<vmem>>, %arg3: memref<1x1x128xf32, #tpu.memory_space<vmem>>) attributes {dimension_semantics = [#tpu.dimension_semantics<parallel>], iteration_bounds = array<i64: 1>, scalar_prefetch = 0 : i64, scratch_operands = 0 : i64, tpu.core_type = #tpu.core_type<tc>, window_params = [{transform_indices = @transform_0, window_bounds = array<i64: 3, 128>}, {transform_indices = @transform_1, window_bounds = array<i64: 1, 128>}, {transform_indices = @transform_2, window_bounds = array<i64: 1, 1, 128>}]} {
    %c0 = arith.constant 0 : index
    %c0_0 = arith.constant 0 : index
    %0 = vector.load %arg1[%c0, %c0_0] : memref<3x128xf32, #tpu.memory_space<vmem>>, vector<3x128xf32>
    %c0_1 = arith.constant 0 : index
    %c0_2 = arith.constant 0 : index
    %1 = vector.load %arg2[%c0_1, %c0_2] : memref<1x128xi32, #tpu.memory_space<vmem>>, vector<1x128xi32>
    %2 = vector.extract_strided_slice %0 {offsets = [0, 0], sizes = [1, 128], strides = [1, 1]} : vector<3x128xf32> to vector<1x128xf32>
    %3 = vector.extract_strided_slice %0 {offsets = [1, 0], sizes = [1, 128], strides = [1, 1]} : vector<3x128xf32> to vector<1x128xf32>
    %4 = arith.maximumf %2, %3 : vector<1x128xf32>
    %5 = vector.extract_strided_slice %0 {offsets = [2, 0], sizes = [1, 128], strides = [1, 1]} : vector<3x128xf32> to vector<1x128xf32>
    %6 = arith.maximumf %4, %5 : vector<1x128xf32>
    %7 = vector.broadcast %6 : vector<1x128xf32> to vector<3x128xf32>
    %8 = arith.subf %0, %7 : vector<3x128xf32>
    %9 = math.exp %8 : vector<3x128xf32>
    %10 = vector.extract_strided_slice %9 {offsets = [0, 0], sizes = [1, 128], strides = [1, 1]} : vector<3x128xf32> to vector<1x128xf32>
    %11 = vector.extract_strided_slice %9 {offsets = [1, 0], sizes = [1, 128], strides = [1, 1]} : vector<3x128xf32> to vector<1x128xf32>
    %12 = arith.addf %10, %11 : vector<1x128xf32>
    %13 = vector.extract_strided_slice %9 {offsets = [2, 0], sizes = [1, 128], strides = [1, 1]} : vector<3x128xf32> to vector<1x128xf32>
    %14 = arith.addf %12, %13 : vector<1x128xf32>
    %15 = math.log %14 : vector<1x128xf32>
    %16 = arith.addf %15, %6 : vector<1x128xf32>
    %cst = arith.constant 0.000000e+00 : f32
    %17 = vector.broadcast %cst : f32 to vector<1x128xf32>
    %cst_3 = arith.constant 0.000000e+00 : f32
    %18 = vector.broadcast %cst_3 : f32 to vector<1x128xf32>
    %cst_4 = arith.constant 0.000000e+00 : f32
    %19 = vector.broadcast %cst_4 : f32 to vector<1x128xf32>
    %c0_i32 = arith.constant 0 : i32
    %20 = vector.broadcast %c0_i32 : i32 to vector<1x128xi32>
    %21 = arith.cmpi eq, %1, %20 : vector<1x128xi32>
    %22 = vector.extract_strided_slice %0 {offsets = [0, 0], sizes = [1, 128], strides = [1, 1]} : vector<3x128xf32> to vector<1x128xf32>
    %23 = arith.select %21, %22, %17 : vector<1x128xi1>, vector<1x128xf32>
    %24 = vector.extract_strided_slice %9 {offsets = [0, 0], sizes = [1, 128], strides = [1, 1]} : vector<3x128xf32> to vector<1x128xf32>
    %25 = arith.select %21, %24, %18 : vector<1x128xi1>, vector<1x128xf32>
    %cst_5 = arith.constant 2.000000e-01 : f32
    %26 = vector.broadcast %cst_5 : f32 to vector<1x128xf32>
    %27 = arith.select %21, %26, %19 : vector<1x128xi1>, vector<1x128xf32>
    %c1_i32 = arith.constant 1 : i32
    %28 = vector.broadcast %c1_i32 : i32 to vector<1x128xi32>
    %29 = arith.cmpi eq, %1, %28 : vector<1x128xi32>
    %30 = vector.extract_strided_slice %0 {offsets = [1, 0], sizes = [1, 128], strides = [1, 1]} : vector<3x128xf32> to vector<1x128xf32>
    %31 = arith.select %29, %30, %23 : vector<1x128xi1>, vector<1x128xf32>
    %32 = vector.extract_strided_slice %9 {offsets = [1, 0], sizes = [1, 128], strides = [1, 1]} : vector<3x128xf32> to vector<1x128xf32>
    %33 = arith.select %29, %32, %25 : vector<1x128xi1>, vector<1x128xf32>
    %cst_6 = arith.constant 3.000000e-01 : f32
    %34 = vector.broadcast %cst_6 : f32 to vector<1x128xf32>
    %35 = arith.select %29, %34, %27 : vector<1x128xi1>, vector<1x128xf32>
    %c2_i32 = arith.constant 2 : i32
    %36 = vector.broadcast %c2_i32 : i32 to vector<1x128xi32>
    %37 = arith.cmpi eq, %1, %36 : vector<1x128xi32>
    %38 = vector.extract_strided_slice %0 {offsets = [2, 0], sizes = [1, 128], strides = [1, 1]} : vector<3x128xf32> to vector<1x128xf32>
    %39 = arith.select %37, %38, %31 : vector<1x128xi1>, vector<1x128xf32>
    %40 = vector.extract_strided_slice %9 {offsets = [2, 0], sizes = [1, 128], strides = [1, 1]} : vector<3x128xf32> to vector<1x128xf32>
    %41 = arith.select %37, %40, %33 : vector<1x128xi1>, vector<1x128xf32>
    %cst_7 = arith.constant 5.000000e-01 : f32
    %42 = vector.broadcast %cst_7 : f32 to vector<1x128xf32>
    %43 = arith.select %37, %42, %35 : vector<1x128xi1>, vector<1x128xf32>
    %44 = arith.subf %16, %39 : vector<1x128xf32>
    %45 = tpu.reciprocal %14 : vector<1x128xf32> -> vector<1x128xf32>
    %46 = arith.mulf %41, %45 : vector<1x128xf32>
    %cst_8 = arith.constant 1.000000e+00 : f32
    %47 = vector.broadcast %cst_8 : f32 to vector<1x128xf32>
    %48 = arith.subf %47, %46 : vector<1x128xf32>
    %49 = arith.mulf %43, %48 : vector<1x128xf32>
    %50 = arith.mulf %49, %48 : vector<1x128xf32>
    %51 = arith.mulf %50, %44 : vector<1x128xf32>
    %52 = vector.shape_cast %51 : vector<1x128xf32> to vector<1x1x128xf32>
    %cst_9 = arith.constant dense<0.000000e+00> : vector<1xf32>
    %53 = vector.multi_reduction <add>, %52, %cst_9 [1, 2] : vector<1x1x128xf32> to vector<1xf32>
    %54 = vector.shape_cast %53 : vector<1xf32> to vector<1x1x1xf32>
    %55 = vector.extract %54[0, 0, 0] : f32 from vector<1x1x1xf32>
    %56 = vector.broadcast %55 : f32 to vector<1x1x128xf32>
    %c0_10 = arith.constant 0 : index
    %c0_11 = arith.constant 0 : index
    %c0_12 = arith.constant 0 : index
    %57 = vector.load %arg3[%c0_10, %c0_11, %c0_12] : memref<1x1x128xf32, #tpu.memory_space<vmem>>, vector<1x1x128xf32>
    tpu.vector_store %arg3[%c0_10, %c0_11, %c0_12], %56 {strides = array<i32>} : memref<1x1x128xf32, #tpu.memory_space<vmem>>, vector<1x1x128xf32>,
    return
  }
  func.func @transform_0(%arg0: i32) -> (i32, i32) {
    %c0_i32 = arith.constant 0 : i32
    %c0_i32_0 = arith.constant 0 : i32
    return %c0_i32, %arg0 : i32, i32
  }
  func.func @transform_1(%arg0: i32) -> (i32, i32) {
    %c0_i32 = arith.constant 0 : i32
    %c0_i32_0 = arith.constant 0 : i32
    return %c0_i32, %arg0 : i32, i32
  }
  func.func @transform_2(%arg0: i32) -> (i32, i32, i32) {
    %c0_i32 = arith.constant 0 : i32
    %c0_i32_0 = arith.constant 0 : i32
    %c0_i32_1 = arith.constant 0 : i32
    return %arg0, %c0_i32, %c0_i32_0 : i32, i32, i32
  }
}

</mosaic_0001>

<llo_original>
// kernel: tpu_custom_call.1
$region0: #{tpu_custom_call.1}
  #allocation0 [shape = 'u32[]', space=smem, size = 0x4, offset = 0x4, fixed_abs, tag = 'smem constant byte address 0x4 - core index']
  #allocation1 [shape = 'u32[144,128]{1,0:T(1,128)}', space=vmem, size = 0x12000, scoped, tag = 'internal scratch']
  %s0 = inlined_call_operand.hbm [shape: f32[3,128], index: 0, kind: input, shape index: {}]
  %s1 = inlined_call_operand.vmem [shape: s32[1,128], index: 1, kind: input, shape index: {}]
  %s2 = inlined_call_operand.hbm [shape: f32[1,1,128], index: 2, kind: output, shape index: {}]
  %s3 = sld [smem:[#allocation0]]
  $region22: #{tpu_custom_call.1} parent=0
    _
  %s5 = ssub.s32 1, %s3
  %s6 = scalar_select 0, %s5, %s3
  $region1: #{tpu_custom_call.1} parent=0
    #allocation2 [shape = 'u8[2048]{0}', space=vmem, size = 0x800, scoped, tag = 'input window, operand 0, single buffered']
    #allocation3 [shape = 's32[1]{0}', space=sflag, size = 0x4, scoped, tag = 'scoped memory for tpu_custom_call.1']
    #allocation4 [shape = 's32[1]{0}', space=sflag, size = 0x4, scoped, tag = 'scoped memory for tpu_custom_call.1']
    #allocation5 [shape = 'u8[512]{0}', space=vmem, size = 0x400, scoped, tag = 'output window, operand 0, single buffered']
    %7 = vsyncpa [#allocation3], 0
    %8 = vsyncpa [#allocation4], 0
    // Predicated region
    $region2: #{tpu_custom_call.1} parent=1 // pred_check
      _
    $region3: #{tpu_custom_call.1} parent=1 // pred_check_branch
      %10 = sbr.rel (0) target = $region5
    $region4: #{tpu_custom_call.1} parent=1 // pred_region
      %s12 = ssub.s32 64, 64
      %13 = vsyncadd [#allocation3], %s12
      %s15 = sshll.u32 [#allocation2], 4
      %s16 = int_to_ptr.vmem [resolvable:$true] %s15
      %18 = dma.hbm_to_vmem [thread:$0]  %s0, 64, %s16, [#allocation3]
    $region5: #{tpu_custom_call.1} parent=1 // pred_fallthru
      _
    // Predicated region
    $region6: #{tpu_custom_call.1} parent=1 // pred_check
      _
    $region7: #{tpu_custom_call.1} parent=1 // pred_check_branch
      %20 = sbr.rel (0) target = $region9
    $region8: #{tpu_custom_call.1} parent=1 // pred_region
      _
    $region9: #{tpu_custom_call.1} parent=1 // pred_fallthru
      _
    // Predicated region
    $region10: #{tpu_custom_call.1} parent=1 // pred_check
      _
    $region11: #{tpu_custom_call.1} parent=1 // pred_check_branch
      %22 = sbr.rel (0) target = $region13
    $region12: #{tpu_custom_call.1} parent=1 // pred_region
      %23 = dma.done [#allocation3], 64
    $region13: #{tpu_custom_call.1} parent=1 // pred_fallthru
      _
    %v24 = vld [vmem:[#allocation2] sm:$0x7]
    %v25 = vld [vmem:[%s1] sm:$0x1]
    %v27 = vrot.slane %v24, 1
    %v29 = vmax.f32 %v24, %v27
    %v30 = vrot.slane %v24, 2
    %v32 = vmax.f32 %v29, %v30
    %v33 = vlaneseq
    %v34 = vshrl.u32 %v33, 7
    %v35 = vsub.s32 0, %v34
    %v36 = vrot.slane %v32, %v35
    %v37 = vsub.f32 %v24, %v36
    %v38 = vmul.f32 %v37, 1.442695
    %v39 = vpow.pop %v38
    %v41 = vrot.slane %v39, 1
    %v43 = vadd.f32 %v39, %v41
    %v44 = vrot.slane %v39, 2
    %v46 = vadd.f32 %v43, %v44
    %v47 = vlog2.pop %v46
    %v48 = vmul.f32 %v47, 0.6931472
    %v49 = vadd.f32 %v48, %v32
    %vm50 = vcmp.eq.s32.totalorder %v25, 0
    %v51 = vsel %vm50, %v24, 0.0
    %v52 = vsel %vm50, %v39, 0.0
    %v53 = vsel %vm50, 0.2, 0.0
    %vm54 = vcmp.eq.s32.totalorder %v25, 1
    %v56 = vunpack.c.l.s4 1966171168
    %v57 = vunpack.c.0.s8 %v56
    %v58 = vlaneseq
    %v59 = vshrl.u32 %v58, 7
    %v60 = vsub.s32 %v57, %v59
    %v61 = vrot.slane %v24, %v60
    %v62 = vcombine.high %v61, %v61
    %v64 = vunpack.c.l.s4 1966171168
    %v65 = vunpack.c.0.s8 %v64
    %v66 = vlaneseq
    %v67 = vshrl.u32 %v66, 7
    %v68 = vsub.s32 %v65, %v67
    %v69 = vrot.slane %v61, %v68
    %v71 = vunpack.c.l.s4 1966171168
    %v72 = vunpack.c.0.s8 %v71
    %v73 = vlaneseq
    %v74 = vshrl.u32 %v73, 7
    %v75 = vsub.s32 %v72, %v74
    %v76 = vrot.slane %v62, %v75
    %v78 = vsel %vm54, %v76, %v51
    %v80 = vunpack.c.l.s4 1966171168
    %v81 = vunpack.c.0.s8 %v80
    %v82 = vlaneseq
    %v83 = vshrl.u32 %v82, 7
    %v84 = vsub.s32 %v81, %v83
    %v85 = vrot.slane %v39, %v84
    %v86 = vcombine.high %v85, %v85
    %v88 = vunpack.c.l.s4 1966171168
    %v89 = vunpack.c.0.s8 %v88
    %v90 = vlaneseq
    %v91 = vshrl.u32 %v90, 7
    %v92 = vsub.s32 %v89, %v91
    %v93 = vrot.slane %v85, %v92
    %v95 = vunpack.c.l.s4 1966171168
    %v96 = vunpack.c.0.s8 %v95
    %v97 = vlaneseq
    %v98 = vshrl.u32 %v97, 7
    %v99 = vsub.s32 %v96, %v98
    %v100 = vrot.slane %v86, %v99
    %v102 = vsel %vm54, %v100, %v52
    %v103 = vsel %vm54, 0.3, %v53
    %vm104 = vcmp.eq.s32.totalorder %v25, 2
    %v105 = vcombine.high %v69, %v69
    %v107 = vsel %vm104, %v105, %v78
    %v108 = vcombine.high %v93, %v93
    %v110 = vsel %vm104, %v108, %v102
    %v111 = vsel %vm104, 0.5, %v103
    %v112 = vsub.f32 %v49, %v107
    %v113 = vrcp.pop %v46
    %v114 = vmul.f32 %v110, %v113
    %v115 = vsub.f32 1.0, %v114
    %v116 = vmul.f32 %v111, %v115
    %v117 = vmul.f32 %v116, %v115
    %v118 = vmul.f32 %v117, %v112
    %vm119 = vcmask 1040384
    %v120 = vsel %vm119, %v118, 0.0
    %121 = vadd.xlane.f32.xlu0 %v120
    %v122 = vpop.xlane.xlu0 %121
    %v123 = vrot.slane %v122, 4
    %v124 = vadd.f32 %v122, %v123
    %v125 = vrot.slane %v124, 2
    %v126 = vadd.f32 %v124, %v125
    %v127 = vrot.slane %v126, 1
    %v128 = vadd.f32 %v126, %v127
    %s129 = vtos %v128
    %v130 = vstv %s129
    %131 = vst [vmem:[#allocation5] sm:$0x1] %v130
    // Predicated region
    $region14: #{tpu_custom_call.1} parent=1 // pred_check
      _
    $region15: #{tpu_custom_call.1} parent=1 // pred_check_branch
      %133 = sbr.rel (0) target = $region17
    $region16: #{tpu_custom_call.1} parent=1 // pred_region
      %s135 = ssub.s32 16, 16
      %136 = vsyncadd [#allocation4], %s135
      %s138 = sshll.u32 [#allocation5], 4
      %s139 = int_to_ptr.vmem [resolvable:$true] %s138
      %141 = dma.vmem_to_hbm [thread:$0]  %s139, 16, %s2, [#allocation4]
    $region17: #{tpu_custom_call.1} parent=1 // pred_fallthru
      _
    // Predicated region
    $region18: #{tpu_custom_call.1} parent=1 // pred_check
      _
    $region19: #{tpu_custom_call.1} parent=1 // pred_check_branch
      %143 = sbr.rel (0) target = $region21
    $region20: #{tpu_custom_call.1} parent=1 // pred_region
      %144 = dma.done [#allocation4], 16
    $region21: #{tpu_custom_call.1} parent=1 // pred_fallthru
      _
    %145 = vsyncpa [#allocation3], 1
    %146 = vsyncpa [#allocation4], 1

</llo_original>
